<compile_context>
chip_gen: v7x
topology: tpu7x:2x2x1
jax: 0.10.0
libtpu: 0.0.40
codegen_flags: <defaults>
</compile_context>

<pallas_src>
import functools

import jax
import jax.numpy as jnp
from jax.experimental import pallas as pl
from jax.experimental.pallas import tpu as pltpu


def _pow_int(x, n):
    """x ** n for positive integer n via square-and-multiply (VPU-only ops)."""
    result = None
    base = x
    while n > 0:
        if n & 1:
            result = base if result is None else result * base
        n >>= 1
        if n:
            base = base * base
    return result


def _gem_kernel(x_ref, o_ref, *, p, eps, inv_hw):
    # x_ref: (tile_r, H*W) tile in VMEM; o_ref: (tile_r, 1)
    x = x_ref[...].astype(jnp.float32)
    x = jnp.maximum(x, eps)                        # clamp(min=eps)

    # pow(p): integer p -> repeated multiplication on the 4-wide VALU slots;
    # generic exp/log path (EUP) only for non-integer p.
    if float(p).is_integer() and 1 <= int(p) <= 16:
        xp = _pow_int(x, int(p))
    else:
        xp = jnp.power(x, p)

    # Lane-axis sum on the MXU (frees VPU/XLU slots), then mean + 1/p root.
    ones = jnp.ones((xp.shape[-1], 1), dtype=jnp.float32)
    s = jnp.dot(xp, ones, preferred_element_type=jnp.float32)
    m = s * inv_hw                                 # adaptive_avg_pool2d(., 1)
    y = jnp.power(m, 1.0 / p)                      # pow(1/p) on reduced result
    o_ref[...] = y.astype(o_ref.dtype)


def generalized_mean_pooling(x, norm=3.0, eps=1e-6, *,
                             target_tile_bytes=2 * 1024 * 1024):
    """GeM pooling with output_size=1. x: (N, C, H, W) -> (N, C, 1, 1)."""
    assert norm > 0
    p = float(norm)
    N, C, H, W = x.shape
    rows = N * C
    hw = H * W
    x2d = x.reshape(rows, hw)

    # Row tile sized for ~target_tile_bytes per input buffer (the pipeline
    # double-buffers it, so ~2x that lands in VMEM — comfortably under the
    # 16 MiB / 32 MiB scoped defaults on v5e / v6e+v7x). Multiple of 8
    # sublanes, capped at the total row count.
    itemsize = jnp.dtype(x.dtype).itemsize
    tile_r = max(8, target_tile_bytes // max(1, hw * itemsize))
    tile_r = max(8, int(tile_r // 8) * 8)
    if tile_r >= rows:
        tile_r = rows  # full extent -> (8,128) divisibility constraint waived
    grid = (pl.cdiv(rows, tile_r),)

    kernel = functools.partial(_gem_kernel, p=p, eps=float(eps), inv_hw=1.0 / hw)

    out2d = pl.pallas_call(
        kernel,
        out_shape=jax.ShapeDtypeStruct((rows, 1), x.dtype),
        grid_spec=pltpu.PrefetchScalarGridSpec(
            num_scalar_prefetch=0,
            grid=grid,
            in_specs=[pl.BlockSpec((tile_r, hw), lambda i: (i, 0))],
            out_specs=pl.BlockSpec((tile_r, 1), lambda i: (i, 0)),
        ),
        compiler_params=pltpu.CompilerParams(
            # Rows are fully independent -> let v7x shard the grid across its
            # two TensorCores (no effect on single-TC v5e/v6e).
            dimension_semantics=("parallel",),
        ),
    )(x2d)

    return out2d.reshape(N, C, 1, 1)


if __name__ == "__main__":
    key = jax.random.PRNGKey(0)
    N, C, H, W = 2, 4, 16, 16
    x = jax.random.uniform(key, (N, C, H, W), dtype=jnp.float32)

    p, eps = 3.0, 1e-6
    y = generalized_mean_pooling(x, norm=p, eps=eps)
    jax.block_until_ready(y)

    # pure-JAX reference check
    ref = jnp.power(
        jnp.mean(jnp.power(jnp.maximum(x, eps), p), axis=(2, 3), keepdims=True),
        1.0 / p,
    )
    assert y.shape == (N, C, 1, 1)
    assert jnp.allclose(y, ref, rtol=1e-5, atol=1e-6), "mismatch vs reference"

    print("KERNEL_OK")
</pallas_src>

<mosaic_0001>
module attributes {stable_mosaic.version = 11 : i64} {
  func.func @_gem_kernel(%arg0: i32, %arg1: memref<8x256xf32, #tpu.memory_space<vmem>>, %arg2: memref<8x1xf32, #tpu.memory_space<vmem>>) attributes {dimension_semantics = [#tpu.dimension_semantics<parallel>], iteration_bounds = array<i64: 1>, scalar_prefetch = 0 : i64, scratch_operands = 0 : i64, tpu.core_type = #tpu.core_type<tc>, window_params = [{transform_indices = @transform_0, window_bounds = array<i64: 8, 256>}, {transform_indices = @transform_1, window_bounds = array<i64: 8, 1>}]} {
    %c0 = arith.constant 0 : index
    %c0_0 = arith.constant 0 : index
    %0 = vector.load %arg1[%c0, %c0_0] : memref<8x256xf32, #tpu.memory_space<vmem>>, vector<8x256xf32>
    %cst = arith.constant 9.99999997E-7 : f32
    %1 = vector.broadcast %cst : f32 to vector<8x256xf32>
    %2 = arith.maximumf %0, %1 : vector<8x256xf32>
    %3 = arith.mulf %2, %2 : vector<8x256xf32>
    %4 = arith.mulf %2, %3 : vector<8x256xf32>
    %cst_1 = arith.constant 1.000000e+00 : f32
    %5 = vector.broadcast %cst_1 : f32 to vector<256x1xf32>
    %cst_2 = arith.constant dense<0.000000e+00> : vector<8x1xf32>
    %6 = tpu.matmul %4, %5, %cst_2 {dimension_numbers = #tpu.dot_dimension_numbers<[1], [0], [0], [1], [0, 0, 1, 1], [], []>} : vector<8x256xf32>, vector<256x1xf32>, vector<8x1xf32> -> vector<8x1xf32>
    %cst_3 = arith.constant 3.906250e-03 : f32
    %7 = vector.broadcast %cst_3 : f32 to vector<8x1xf32>
    %8 = arith.mulf %6, %7 : vector<8x1xf32>
    %cst_4 = arith.constant 0.333333343 : f32
    %9 = vector.broadcast %cst_4 : f32 to vector<8x1xf32>
    %10 = math.powf %8, %9 : vector<8x1xf32>
    %c0_5 = arith.constant 0 : index
    %c0_6 = arith.constant 0 : index
    %11 = vector.load %arg2[%c0_5, %c0_6] : memref<8x1xf32, #tpu.memory_space<vmem>>, vector<8x1xf32>
    tpu.vector_store %arg2[%c0_5, %c0_6], %10 {strides = array<i32>} : memref<8x1xf32, #tpu.memory_space<vmem>>, vector<8x1xf32>,
    return
  }
  func.func @transform_0(%arg0: i32) -> (i32, i32) {
    %c0_i32 = arith.constant 0 : i32
    %c0_i32_0 = arith.constant 0 : i32
    return %arg0, %c0_i32 : i32, i32
  }
  func.func @transform_1(%arg0: i32) -> (i32, i32) {
    %c0_i32 = arith.constant 0 : i32
    %c0_i32_0 = arith.constant 0 : i32
    return %arg0, %c0_i32 : i32, i32
  }
}

</mosaic_0001>

<llo_original>
// kernel: tpu_custom_call.1
$region0: #{tpu_custom_call.1}
  #allocation0 [shape = 'u32[]', space=smem, size = 0x4, offset = 0x4, fixed_abs, tag = 'smem constant byte address 0x4 - core index']
  #allocation1 [shape = 'u32[144,128]{1,0:T(1,128)}', space=vmem, size = 0x12000, scoped, tag = 'internal scratch']
  %s0 = inlined_call_operand.hbm [shape: f32[8,256], index: 0, kind: input, shape index: {}]
  %s1 = inlined_call_operand.vmem [shape: f32[8,1], index: 1, kind: output, shape index: {}]
  %s2 = sld [smem:[#allocation0]]
  $region18: #{tpu_custom_call.1} parent=0
    _
  %s4 = ssub.s32 1, %s2
  %s5 = scalar_select 0, %s4, %s2
  $region1: #{tpu_custom_call.1} parent=0
    #allocation2 [shape = 'u8[8192]{0}', space=vmem, size = 0x2000, scoped, tag = 'input window, operand 0, single buffered']
    #allocation3 [shape = 's32[1]{0}', space=sflag, size = 0x4, scoped, tag = 'scoped memory for tpu_custom_call.1']
    %6 = vsyncpa [#allocation3], 0
    // Predicated region
    $region2: #{tpu_custom_call.1} parent=1 // pred_check
      _
    $region3: #{tpu_custom_call.1} parent=1 // pred_check_branch
      %8 = sbr.rel (0) target = $region5
    $region4: #{tpu_custom_call.1} parent=1 // pred_region
      %s10 = ssub.s32 256, 256
      %11 = vsyncadd [#allocation3], %s10
      %s13 = sshll.u32 [#allocation2], 4
      %s14 = int_to_ptr.vmem [resolvable:$true] %s13
      %16 = dma.hbm_to_vmem [thread:$0]  %s0, 256, %s14, [#allocation3]
    $region5: #{tpu_custom_call.1} parent=1 // pred_fallthru
      _
    // Predicated region
    $region6: #{tpu_custom_call.1} parent=1 // pred_check
      _
    $region7: #{tpu_custom_call.1} parent=1 // pred_check_branch
      %18 = sbr.rel (0) target = $region9
    $region8: #{tpu_custom_call.1} parent=1 // pred_region
      %19 = dma.done [#allocation3], 256
    $region9: #{tpu_custom_call.1} parent=1 // pred_fallthru
      _
    %v20 = vld [vmem:[#allocation2] sm:$0xff]
    %v21 = vld [vmem:[#allocation2 + $0x8] sm:$0xff]
    %v22 = vmax.f32 %v20, 1e-06
    %v23 = vmax.f32 %v21, 1e-06
    %v24 = vmul.f32 %v22, %v22
    %v25 = vmul.f32 %v23, %v23
    %v26 = vmul.f32 %v22, %v24
    %v27 = vmul.f32 %v23, %v25
    %28 = vmatprep.subr.mxu0 0.0
    %29 = vmatpush1.msra.mxu0 1.0
    %30 = vmatprep.subr.mxu0 0.0
    %31 = vmatpush1.msra.mxu0 1.0
    %32 = vmatprep.subr.mxu0 0.0
    %33 = vmatpush1.msra.mxu0 1.0
    %34 = vmatprep.subr.mxu0 0.0
    %35 = vmatpush1.msra.mxu0 1.0
    %36 = vmatprep.subr.mxu0 0.0
    %37 = vmatpush1.msra.mxu0 1.0
    %38 = vmatprep.subr.mxu0 0.0
    %39 = vmatpush1.msra.mxu0 1.0
    %40 = vmatprep.subr.mxu0 0.0
    %41 = vmatpush1.msra.mxu0 1.0
    %42 = vmatprep.subr.mxu0 0.0
    %43 = vmatpush1.msra.mxu0 1.0
    %44 = vmatprep.subr.mxu0 0.0
    %45 = vmatpush1.msra.mxu0 1.0
    %46 = vmatprep.subr.mxu0 0.0
    %47 = vmatpush1.msra.mxu0 1.0
    %48 = vmatprep.subr.mxu0 0.0
    %49 = vmatpush1.msra.mxu0 1.0
    %50 = vmatprep.subr.mxu0 0.0
    %51 = vmatpush1.msra.mxu0 1.0
    %52 = vmatprep.subr.mxu0 0.0
    %53 = vmatpush1.msra.mxu0 1.0
    %54 = vmatprep.subr.mxu0 0.0
    %55 = vmatpush1.msra.mxu0 1.0
    %56 = vmatprep.subr.mxu0 0.0
    %57 = vmatpush1.msra.mxu0 1.0
    %58 = vmatprep.subr.mxu0 0.0
    %59 = vmatpush1.msra.mxu0 1.0
    %60 = vmatprep.subr.mxu0 0.0
    %61 = vmatpush1.msra.mxu0 1.0
    %62 = vmatprep.subr.mxu0 0.0
    %63 = vmatpush1.msra.mxu0 1.0
    %64 = vmatprep.subr.mxu0 0.0
    %65 = vmatpush1.msra.mxu0 1.0
    %66 = vmatprep.subr.mxu0 0.0
    %67 = vmatpush1.msra.mxu0 1.0
    %68 = vmatprep.subr.mxu0 0.0
    %69 = vmatpush1.msra.mxu0 1.0
    %70 = vmatprep.subr.mxu0 0.0
    %71 = vmatpush1.msra.mxu0 1.0
    %72 = vmatprep.subr.mxu0 0.0
    %73 = vmatpush1.msra.mxu0 1.0
    %74 = vmatprep.subr.mxu0 0.0
    %75 = vmatpush1.msra.mxu0 1.0
    %76 = vmatprep.subr.mxu0 0.0
    %77 = vmatpush1.msra.mxu0 1.0
    %78 = vmatprep.subr.mxu0 0.0
    %79 = vmatpush1.msra.mxu0 1.0
    %80 = vmatprep.subr.mxu0 0.0
    %81 = vmatpush1.msra.mxu0 1.0
    %82 = vmatprep.subr.mxu0 0.0
    %83 = vmatpush1.msra.mxu0 1.0
    %84 = vmatprep.subr.mxu0 0.0
    %85 = vmatpush1.msra.mxu0 1.0
    %86 = vmatprep.subr.mxu0 0.0
    %87 = vmatpush1.msra.mxu0 1.0
    %88 = vmatprep.subr.mxu0 0.0
    %89 = vmatpush1.msra.mxu0 1.0
    %90 = vmatprep.subr.mxu0 0.0
    %91 = vmatpush1.msra.mxu0 1.0
    %92 = vmatprep.mubr.f32.mxu0 %v27
    %93 = vmatmul.mubr.f32.gmra.mrb[0].mxu0 %v26
    %v94 = vpop.f32.mrb[0].mxu0
    %v95 = vadd.f32 0.0, %v94
    %v96 = vpop.f32.mrb[0].mxu0
    %97 = vdwg.mxu0
    %v98 = vmul.f32 %v95, 0.00390625
    %v99 = vpow.f32 %v98, 0.33333334
    %vm100 = vcmask 7168
    %101 = vst.msk [vmem:[%s1] sm:$0xff] %vm100, %v99
    // Predicated region
    $region10: #{tpu_custom_call.1} parent=1 // pred_check
      _
    $region11: #{tpu_custom_call.1} parent=1 // pred_check_branch
      %103 = sbr.rel (0) target = $region13
    $region12: #{tpu_custom_call.1} parent=1 // pred_region
      _
    $region13: #{tpu_custom_call.1} parent=1 // pred_fallthru
      _
    // Predicated region
    $region14: #{tpu_custom_call.1} parent=1 // pred_check
      _
    $region15: #{tpu_custom_call.1} parent=1 // pred_check_branch
      %105 = sbr.rel (0) target = $region17
    $region16: #{tpu_custom_call.1} parent=1 // pred_region
      _
    $region17: #{tpu_custom_call.1} parent=1 // pred_fallthru
      _
    %106 = vsyncpa [#allocation3], 1

</llo_original>
